<compile_context>
chip_gen: v7x
topology: tpu7x:2x2x1
jax: 0.10.0
libtpu: 0.0.40
codegen_flags: <defaults>
</compile_context>

<pallas_src>
import jax
import jax.numpy as jnp
import numpy as np
from jax.experimental import pallas as pl
from jax.experimental.pallas import tpu as pltpu

_BN_EPS = 1e-5
_LANE = 128
_VMEM_LIMIT = 32 * 1024 * 1024  # explicit scoped-VMEM budget (safe on v5e/v6e/v7x)


def _round_up(x, m):
    return ((x + m - 1) // m) * m


# --------------------------------------------------------------------------
# Pass 1: conv as one fused-K matmul per (M-tile, K-tile), accumulated into the
# resident f32 output block, plus per-tile channel sum / sum-of-squares.
# --------------------------------------------------------------------------
def _conv_stats_kernel(lhs_ref, rhs_ref, y_ref, psum_ref, psumsq_ref):
    k = pl.program_id(1)

    partial = jnp.dot(lhs_ref[...], rhs_ref[...], preferred_element_type=jnp.float32)

    @pl.when(k == 0)
    def _():
        y_ref[...] = partial

    @pl.when(k > 0)
    def _():
        y_ref[...] += partial

    @pl.when(k == pl.num_programs(1) - 1)
    def _():
        # Single pass over the resident block: sum and sum-of-squares together.
        y = y_ref[...]
        psum_ref[0] = jnp.sum(y, axis=0, keepdims=True)
        psumsq_ref[0] = jnp.sum(y * y, axis=0, keepdims=True)


# --------------------------------------------------------------------------
# Pass 2: per-channel affine (folds conv-bias + BatchNorm) followed by ELU.
# --------------------------------------------------------------------------
def _bn_elu_kernel(y_ref, scale_ref, shift_ref, o_ref):
    z = y_ref[...] * scale_ref[...] + shift_ref[...]
    elu = jnp.where(z > 0, z, jnp.exp(jnp.minimum(z, 0.0)) - 1.0)
    # Dropout2d with keep_prob=1 -> p=0 -> identity.
    # TODO(synk): for keep_prob < 1 add a per-channel mask via pltpu.prng_* .
    o_ref[...] = elu.astype(o_ref.dtype)


def sf_conv2d(x_nchw, weight, bias, gamma, beta, *, k_size=3, dilation=1):
    """Forward of SF_Conv2d. x_nchw: (N, Cin, H, W); weight: (Cout, Cin, KH, KW)."""
    N, Cin, H, W = x_nchw.shape
    Cout = weight.shape[0]
    KH = KW = k_size
    KT = KH * KW
    M = N * H * W
    K = KT * Cin
    pad = (k_size // 2) * dilation

    # ---- tiling parameters -------------------------------------------------
    Cout_pad = _round_up(Cout, _LANE)                   # lane-dense output / MXU N dim
    TM = 512 if M >= 512 else _round_up(M, 16)          # 512-row M tiles (fits v7x VMEM)
    M_pad = _round_up(M, TM)
    M_tiles = M_pad // TM
    if K > 512:
        KTILE = 256                                     # 2x256 MXU on v6e/v7x (128 fills v5e)
        K_pad = _round_up(K, KTILE)
    else:
        K_pad = _round_up(K, 16)                        # single reduction step
        KTILE = K_pad
    K_steps = K_pad // KTILE

    # ---- glue: im2col once, fold taps into the contraction dim (bf16) ------
    xh = jnp.transpose(x_nchw, (0, 2, 3, 1)).astype(jnp.bfloat16)          # NHWC
    xp = jnp.pad(xh, ((0, 0), (pad, pad), (pad, pad), (0, 0)))
    cols = jnp.concatenate(
        [xp[:, kh * dilation:kh * dilation + H,
                kw * dilation:kw * dilation + W, :]
         for kh in range(KH) for kw in range(KW)],
        axis=-1,
    )                                                                      # (N,H,W,KT*Cin)
    lhs = cols.reshape(M, K)
    lhs = jnp.pad(lhs, ((0, M_pad - M), (0, K_pad - K)))   # zero rows/cols: inert for conv & stats

    rhs = jnp.transpose(weight, (2, 3, 1, 0)).reshape(K, Cout).astype(jnp.bfloat16)
    rhs = jnp.pad(rhs, ((0, K_pad - K), (0, Cout_pad - Cout)))

    # ---- pass 1: conv + per-tile channel stats ------------------------------
    y, psum, psumsq = pl.pallas_call(
        _conv_stats_kernel,
        out_shape=(
            jax.ShapeDtypeStruct((M_pad, Cout_pad), jnp.float32),
            jax.ShapeDtypeStruct((M_tiles, 1, Cout_pad), jnp.float32),
            jax.ShapeDtypeStruct((M_tiles, 1, Cout_pad), jnp.float32),
        ),
        grid_spec=pltpu.PrefetchScalarGridSpec(
            num_scalar_prefetch=0,
            grid=(M_tiles, K_steps),
            in_specs=[
                pl.BlockSpec((TM, KTILE), lambda i, k: (i, k)),
                pl.BlockSpec((KTILE, Cout_pad), lambda i, k: (k, 0)),
            ],
            out_specs=[
                pl.BlockSpec((TM, Cout_pad), lambda i, k: (i, 0)),      # resident accumulator
                pl.BlockSpec((1, 1, Cout_pad), lambda i, k: (i, 0, 0)),
                pl.BlockSpec((1, 1, Cout_pad), lambda i, k: (i, 0, 0)),
            ],
        ),
        compiler_params=pltpu.CompilerParams(
            dimension_semantics=("parallel", "arbitrary"),
            vmem_limit_bytes=_VMEM_LIMIT,
        ),
    )(lhs, rhs)

    # ---- combine stats (tiny, plain JAX) ------------------------------------
    # Padded M rows and padded K columns are exact zeros, so they contribute
    # nothing to sum / sumsq; divide by the true M.
    tot = jnp.sum(psum, axis=(0, 1))                     # (Cout_pad,)
    totsq = jnp.sum(psumsq, axis=(0, 1))
    bias_p = jnp.pad(bias.astype(jnp.float32), (0, Cout_pad - Cout))
    gamma_p = jnp.pad(gamma.astype(jnp.float32), (0, Cout_pad - Cout))
    beta_p = jnp.pad(beta.astype(jnp.float32), (0, Cout_pad - Cout))

    mean_conv = tot / M
    # One-pass variance; var(conv + bias) == var(conv). Guard tiny negatives.
    var = jnp.maximum(totsq / M - mean_conv * mean_conv, 0.0)
    mean = mean_conv + bias_p                            # batch mean of conv(x) + bias
    scale = gamma_p * jax.lax.rsqrt(var + _BN_EPS)
    # z = (y + bias - mean) * scale + beta  ==  y * scale + shift
    shift = (bias_p - mean) * scale + beta_p
    scale2 = scale.reshape(1, Cout_pad)
    shift2 = shift.reshape(1, Cout_pad)

    # ---- pass 2: bias+BN (as affine) + ELU, lane-dense & M-tiled ------------
    out = pl.pallas_call(
        _bn_elu_kernel,
        out_shape=jax.ShapeDtypeStruct((M_pad, Cout_pad), x_nchw.dtype),
        grid_spec=pltpu.PrefetchScalarGridSpec(
            num_scalar_prefetch=0,
            grid=(M_tiles,),
            in_specs=[
                pl.BlockSpec((TM, Cout_pad), lambda i: (i, 0)),
                pl.BlockSpec((1, Cout_pad), lambda i: (0, 0)),
                pl.BlockSpec((1, Cout_pad), lambda i: (0, 0)),
            ],
            out_specs=pl.BlockSpec((TM, Cout_pad), lambda i: (i, 0)),
        ),
        compiler_params=pltpu.CompilerParams(
            dimension_semantics=("parallel",),
            vmem_limit_bytes=_VMEM_LIMIT,
        ),
    )(y, scale2, shift2)

    out = out[:M, :Cout].reshape(N, H, W, Cout)
    return jnp.transpose(out, (0, 3, 1, 2))              # back to NCHW


# --------------------------------------------------------------------------
# Reference (plain JAX). Uses the same mixed-precision policy as the kernel
# (bf16 conv operands, f32 accumulation) so the comparison is apples-to-apples.
# --------------------------------------------------------------------------
def _reference(x, w, b, gamma, beta, *, k_size=3, dilation=1):
    pad = (k_size // 2) * dilation
    y = jax.lax.conv_general_dilated(
        x.astype(jnp.bfloat16), w.astype(jnp.bfloat16),
        window_strides=(1, 1),
        padding=((pad, pad), (pad, pad)),
        rhs_dilation=(dilation, dilation),
        dimension_numbers=("NCHW", "OIHW", "NCHW"),
        preferred_element_type=jnp.float32)
    y = y + b.reshape(1, -1, 1, 1)
    mean = jnp.mean(y, axis=(0, 2, 3), keepdims=True)
    var = jnp.mean((y - mean) ** 2, axis=(0, 2, 3), keepdims=True)
    z = (y - mean) * jax.lax.rsqrt(var + _BN_EPS)
    z = z * gamma.reshape(1, -1, 1, 1) + beta.reshape(1, -1, 1, 1)
    return jnp.where(z > 0, z, jnp.exp(jnp.minimum(z, 0.0)) - 1.0)


if __name__ == "__main__":
    N, Cin, H, W = 2, 4, 16, 16
    Cout, k_size, dilation = 8, 3, 1

    key = jax.random.PRNGKey(0)
    kx, kw, kb, kg, kbeta = jax.random.split(key, 5)

    x = jax.random.normal(kx, (N, Cin, H, W), dtype=jnp.float32)
    # Deterministic synthetic parameters (shapes match nn.Conv2d / nn.BatchNorm2d).
    weight = jax.random.normal(kw, (Cout, Cin, k_size, k_size), dtype=jnp.float32) * 0.1
    bias = jax.random.normal(kb, (Cout,), dtype=jnp.float32) * 0.1
    gamma = 1.0 + 0.1 * jax.random.normal(kg, (Cout,), dtype=jnp.float32)
    beta = 0.1 * jax.random.normal(kbeta, (Cout,), dtype=jnp.float32)

    out = jax.block_until_ready(
        sf_conv2d(x, weight, bias, gamma, beta, k_size=k_size, dilation=dilation))
    ref = jax.block_until_ready(
        _reference(x, weight, bias, gamma, beta, k_size=k_size, dilation=dilation))

    np.testing.assert_allclose(np.asarray(out), np.asarray(ref), rtol=1e-3, atol=1e-3)
    print("KERNEL_OK")
</pallas_src>

<mosaic_0001>
module attributes {stable_mosaic.version = 11 : i64} {
  func.func @_conv_stats_kernel(%arg0: i32, %arg1: i32, %arg2: memref<512x48xbf16, #tpu.memory_space<vmem>>, %arg3: memref<48x128xbf16, #tpu.memory_space<vmem>>, %arg4: memref<512x128xf32, #tpu.memory_space<vmem>>, %arg5: memref<1x1x128xf32, #tpu.memory_space<vmem>>, %arg6: memref<1x1x128xf32, #tpu.memory_space<vmem>>) attributes {dimension_semantics = [#tpu.dimension_semantics<parallel>, #tpu.dimension_semantics<arbitrary>], iteration_bounds = array<i64: 1, 1>, scalar_prefetch = 0 : i64, scratch_operands = 0 : i64, tpu.core_type = #tpu.core_type<tc>, window_params = [{transform_indices = @transform_0, window_bounds = array<i64: 512, 48>}, {transform_indices = @transform_1, window_bounds = array<i64: 48, 128>}, {transform_indices = @transform_2, window_bounds = array<i64: 512, 128>}, {transform_indices = @transform_3, window_bounds = array<i64: 1, 1, 128>}, {transform_indices = @transform_4, window_bounds = array<i64: 1, 1, 128>}]} {
    %c0 = arith.constant 0 : index
    %c0_0 = arith.constant 0 : index
    %0 = vector.load %arg2[%c0, %c0_0] : memref<512x48xbf16, #tpu.memory_space<vmem>>, vector<512x48xbf16>
    %c0_1 = arith.constant 0 : index
    %c0_2 = arith.constant 0 : index
    %1 = vector.load %arg3[%c0_1, %c0_2] : memref<48x128xbf16, #tpu.memory_space<vmem>>, vector<48x128xbf16>
    %cst = arith.constant dense<0.000000e+00> : vector<512x128xf32>
    %2 = tpu.matmul %0, %1, %cst {dimension_numbers = #tpu.dot_dimension_numbers<[1], [0], [0], [1], [0, 0, 1, 1], [], []>} : vector<512x48xbf16>, vector<48x128xbf16>, vector<512x128xf32> -> vector<512x128xf32>
    %c0_i32 = arith.constant 0 : i32
    %3 = arith.cmpi eq, %arg1, %c0_i32 : i32
    %4 = arith.extui %3 : i1 to i32
    %c0_i32_3 = arith.constant 0 : i32
    %5 = arith.cmpi ne, %4, %c0_i32_3 : i32
    scf.if %5 {
      %c0_8 = arith.constant 0 : index
      %c0_9 = arith.constant 0 : index
      %12 = vector.load %arg4[%c0_8, %c0_9] : memref<512x128xf32, #tpu.memory_space<vmem>>, vector<512x128xf32>
      tpu.vector_store %arg4[%c0_8, %c0_9], %2 {strides = array<i32>} : memref<512x128xf32, #tpu.memory_space<vmem>>, vector<512x128xf32>,
    } else {
    }
    %c0_i32_4 = arith.constant 0 : i32
    %6 = arith.cmpi sgt, %arg1, %c0_i32_4 : i32
    %7 = arith.extui %6 : i1 to i32
    %c0_i32_5 = arith.constant 0 : i32
    %8 = arith.cmpi ne, %7, %c0_i32_5 : i32
    scf.if %8 {
      %c0_8 = arith.constant 0 : index
      %c0_9 = arith.constant 0 : index
      %12 = vector.load %arg4[%c0_8, %c0_9] : memref<512x128xf32, #tpu.memory_space<vmem>>, vector<512x128xf32>
      %13 = arith.addf %12, %2 : vector<512x128xf32>
      %c0_10 = arith.constant 0 : index
      %c0_11 = arith.constant 0 : index
      %14 = vector.load %arg4[%c0_10, %c0_11] : memref<512x128xf32, #tpu.memory_space<vmem>>, vector<512x128xf32>
      tpu.vector_store %arg4[%c0_10, %c0_11], %13 {strides = array<i32>} : memref<512x128xf32, #tpu.memory_space<vmem>>, vector<512x128xf32>,
    } else {
    }
    %c0_i32_6 = arith.constant 0 : i32
    %9 = arith.cmpi eq, %arg1, %c0_i32_6 : i32
    %10 = arith.extui %9 : i1 to i32
    %c0_i32_7 = arith.constant 0 : i32
    %11 = arith.cmpi ne, %10, %c0_i32_7 : i32
    scf.if %11 {
      %c0_8 = arith.constant 0 : index
      %c0_9 = arith.constant 0 : index
      %12 = vector.load %arg4[%c0_8, %c0_9] : memref<512x128xf32, #tpu.memory_space<vmem>>, vector<512x128xf32>
      %cst_10 = arith.constant dense<0.000000e+00> : vector<128xf32>
      %13 = vector.multi_reduction <add>, %12, %cst_10 [0] : vector<512x128xf32> to vector<128xf32>
      %14 = vector.shape_cast %13 : vector<128xf32> to vector<1x128xf32>
      %c0_11 = arith.constant 0 : index
      %c0_12 = arith.constant 0 : index
      %c0_13 = arith.constant 0 : index
      %15 = vector.load %arg5[%c0_11, %c0_12, %c0_13] : memref<1x1x128xf32, #tpu.memory_space<vmem>>, vector<1x1x128xf32>
      %16 = vector.shape_cast %15 : vector<1x1x128xf32> to vector<1x128xf32>
      %17 = vector.shape_cast %14 : vector<1x128xf32> to vector<1x1x128xf32>
      tpu.vector_store %arg5[%c0_11, %c0_12, %c0_13], %17 {strides = array<i32>} : memref<1x1x128xf32, #tpu.memory_space<vmem>>, vector<1x1x128xf32>,
      %18 = arith.mulf %12, %12 : vector<512x128xf32>
      %cst_14 = arith.constant dense<0.000000e+00> : vector<128xf32>
      %19 = vector.multi_reduction <add>, %18, %cst_14 [0] : vector<512x128xf32> to vector<128xf32>
      %20 = vector.shape_cast %19 : vector<128xf32> to vector<1x128xf32>
      %c0_15 = arith.constant 0 : index
      %c0_16 = arith.constant 0 : index
      %c0_17 = arith.constant 0 : index
      %21 = vector.load %arg6[%c0_15, %c0_16, %c0_17] : memref<1x1x128xf32, #tpu.memory_space<vmem>>, vector<1x1x128xf32>
      %22 = vector.shape_cast %21 : vector<1x1x128xf32> to vector<1x128xf32>
      %23 = vector.shape_cast %20 : vector<1x128xf32> to vector<1x1x128xf32>
      tpu.vector_store %arg6[%c0_15, %c0_16, %c0_17], %23 {strides = array<i32>} : memref<1x1x128xf32, #tpu.memory_space<vmem>>, vector<1x1x128xf32>,
    } else {
    }
    return
  }
  func.func @transform_0(%arg0: i32, %arg1: i32) -> (i32, i32) {
    %c0_i32 = arith.constant 0 : i32
    return %arg0, %arg1 : i32, i32
  }
  func.func @transform_1(%arg0: i32, %arg1: i32) -> (i32, i32) {
    %c0_i32 = arith.constant 0 : i32
    %c0_i32_0 = arith.constant 0 : i32
    return %arg1, %c0_i32 : i32, i32
  }
  func.func @transform_2(%arg0: i32, %arg1: i32) -> (i32, i32) {
    %c0_i32 = arith.constant 0 : i32
    %c0_i32_0 = arith.constant 0 : i32
    return %arg0, %c0_i32 : i32, i32
  }
  func.func @transform_3(%arg0: i32, %arg1: i32) -> (i32, i32, i32) {
    %c0_i32 = arith.constant 0 : i32
    %c0_i32_0 = arith.constant 0 : i32
    %c0_i32_1 = arith.constant 0 : i32
    return %arg0, %c0_i32, %c0_i32_0 : i32, i32, i32
  }
  func.func @transform_4(%arg0: i32, %arg1: i32) -> (i32, i32, i32) {
    %c0_i32 = arith.constant 0 : i32
    %c0_i32_0 = arith.constant 0 : i32
    %c0_i32_1 = arith.constant 0 : i32
    return %arg0, %c0_i32, %c0_i32_0 : i32, i32, i32
  }
}

</mosaic_0001>

<llo_original>
// kernel: tpu_custom_call.1
$region0: #{tpu_custom_call.1}
  #allocation0 [shape = 'u32[]', space=smem, size = 0x4, offset = 0x4, fixed_abs, tag = 'smem constant byte address 0x4 - core index']
  #allocation1 [shape = 'u32[144,128]{1,0:T(1,128)}', space=vmem, size = 0x12000, scoped, tag = 'internal scratch']
  %s0 = inlined_call_operand.vmem [shape: bf16[512,48], index: 0, kind: input, shape index: {}]
  %s1 = inlined_call_operand.vmem [shape: bf16[48,128], index: 1, kind: input, shape index: {}]
  %s2 = inlined_call_operand.hbm [shape: f32[512,128], index: 2, kind: output, shape index: {0}]
  %s3 = inlined_call_operand.hbm [shape: f32[1,1,128], index: 3, kind: output, shape index: {1}]
  %s4 = inlined_call_operand.hbm [shape: f32[1,1,128], index: 4, kind: output, shape index: {2}]
  %5 = xla_tuple %s2, %s3, %s4
  %s6 = sld [smem:[#allocation0]]
  $region46: #{tpu_custom_call.1} parent=0
    _
  %s8 = ssub.s32 1, %s6
  %s9 = scalar_select 0, %s8, %s6
  $region1: #{tpu_custom_call.1} parent=0
    #allocation2 [shape = 'u8[262144]{0}', space=vmem, size = 0x40000, scoped, tag = 'output window, operand 0, single buffered']
    #allocation3 [shape = 's32[1]{0}', space=sflag, size = 0x4, scoped, tag = 'scoped memory for tpu_custom_call.1']
    #allocation4 [shape = 'u8[512]{0}', space=vmem, size = 0x400, scoped, tag = 'output window, operand 1, single buffered']
    #allocation5 [shape = 's32[1]{0}', space=sflag, size = 0x4, scoped, tag = 'scoped memory for tpu_custom_call.1']
    #allocation6 [shape = 'u8[512]{0}', space=vmem, size = 0x400, scoped, tag = 'output window, operand 2, single buffered']
    %10 = vsyncpa [#allocation3], 0
    %11 = vsyncpa [#allocation5], 0
    // Predicated region
    $region2: #{tpu_custom_call.1} parent=1 // pred_check
      _
    $region3: #{tpu_custom_call.1} parent=1 // pred_check_branch
      %13 = sbr.rel (0) target = $region5
    $region4: #{tpu_custom_call.1} parent=1 // pred_region
      _
    $region5: #{tpu_custom_call.1} parent=1 // pred_fallthru
      _
    // Predicated region
    $region6: #{tpu_custom_call.1} parent=1 // pred_check
      _
    $region7: #{tpu_custom_call.1} parent=1 // pred_check_branch
      %15 = sbr.rel (0) target = $region9
    $region8: #{tpu_custom_call.1} parent=1 // pred_region
      _
    $region9: #{tpu_custom_call.1} parent=1 // pred_fallthru
      _
    %v17 = vld [vmem:[%s0] sm:$0xf]
    %v18 = vld [vmem:[%s0 + $0x4] sm:$0xf]
    %v19 = vld [vmem:[%s0 + $0x8] sm:$0xf]
    %v20 = vld [vmem:[%s0 + $0xc] sm:$0xf]
    %v21 = vld [vmem:[%s0 + $0x10] sm:$0xf]
    %v22 = vld [vmem:[%s0 + $0x14] sm:$0xf]
    %v23 = vld [vmem:[%s0 + $0x18] sm:$0xf]
    %v24 = vld [vmem:[%s0 + $0x1c] sm:$0xf]
    %v25 = vld [vmem:[%s0 + $0x20] sm:$0xf]
    %v26 = vld [vmem:[%s0 + $0x24] sm:$0xf]
    %v27 = vld [vmem:[%s0 + $0x28] sm:$0xf]
    %v28 = vld [vmem:[%s0 + $0x2c] sm:$0xf]
    %v29 = vld [vmem:[%s0 + $0x30] sm:$0xf]
    %v30 = vld [vmem:[%s0 + $0x34] sm:$0xf]
    %v31 = vld [vmem:[%s0 + $0x38] sm:$0xf]
    %v32 = vld [vmem:[%s0 + $0x3c] sm:$0xf]
    %v33 = vld [vmem:[%s0 + $0x40] sm:$0xf]
    %v34 = vld [vmem:[%s0 + $0x44] sm:$0xf]
    %v35 = vld [vmem:[%s0 + $0x48] sm:$0xf]
    %v36 = vld [vmem:[%s0 + $0x4c] sm:$0xf]
    %v37 = vld [vmem:[%s0 + $0x50] sm:$0xf]
    %v38 = vld [vmem:[%s0 + $0x54] sm:$0xf]
    %v39 = vld [vmem:[%s0 + $0x58] sm:$0xf]
    %v40 = vld [vmem:[%s0 + $0x5c] sm:$0xf]
    %v41 = vld [vmem:[%s0 + $0x60] sm:$0xf]
    %v42 = vld [vmem:[%s0 + $0x64] sm:$0xf]
    %v43 = vld [vmem:[%s0 + $0x68] sm:$0xf]
    %v44 = vld [vmem:[%s0 + $0x6c] sm:$0xf]
    %v45 = vld [vmem:[%s0 + $0x70] sm:$0xf]
    %v46 = vld [vmem:[%s0 + $0x74] sm:$0xf]
    %v47 = vld [vmem:[%s0 + $0x78] sm:$0xf]
    %v48 = vld [vmem:[%s0 + $0x7c] sm:$0xf]
    %v49 = vld [vmem:[%s0 + $0x80] sm:$0xf]
    %v50 = vld [vmem:[%s0 + $0x84] sm:$0xf]
    %v51 = vld [vmem:[%s0 + $0x88] sm:$0xf]
    %v52 = vld [vmem:[%s0 + $0x8c] sm:$0xf]
    %v53 = vld [vmem:[%s0 + $0x90] sm:$0xf]
    %v54 = vld [vmem:[%s0 + $0x94] sm:$0xf]
    %v55 = vld [vmem:[%s0 + $0x98] sm:$0xf]
    %v56 = vld [vmem:[%s0 + $0x9c] sm:$0xf]
    %v57 = vld [vmem:[%s0 + $0xa0] sm:$0xf]
    %v58 = vld [vmem:[%s0 + $0xa4] sm:$0xf]
    %v59 = vld [vmem:[%s0 + $0xa8] sm:$0xf]
    %v60 = vld [vmem:[%s0 + $0xac] sm:$0xf]
    %v61 = vld [vmem:[%s0 + $0xb0] sm:$0xf]
    %v62 = vld [vmem:[%s0 + $0xb4] sm:$0xf]
    %v63 = vld [vmem:[%s0 + $0xb8] sm:$0xf]
    %v64 = vld [vmem:[%s0 + $0xbc] sm:$0xf]
    %v65 = vld [vmem:[%s0 + $0xc0] sm:$0xf]
    %v66 = vld [vmem:[%s0 + $0xc4] sm:$0xf]
    %v67 = vld [vmem:[%s0 + $0xc8] sm:$0xf]
    %v68 = vld [vmem:[%s0 + $0xcc] sm:$0xf]
    %v69 = vld [vmem:[%s0 + $0xd0] sm:$0xf]
    %v70 = vld [vmem:[%s0 + $0xd4] sm:$0xf]
    %v71 = vld [vmem:[%s0 + $0xd8] sm:$0xf]
    %v72 = vld [vmem:[%s0 + $0xdc] sm:$0xf]
    %v73 = vld [vmem:[%s0 + $0xe0] sm:$0xf]
    %v74 = vld [vmem:[%s0 + $0xe4] sm:$0xf]
    %v75 = vld [vmem:[%s0 + $0xe8] sm:$0xf]
    %v76 = vld [vmem:[%s0 + $0xec] sm:$0xf]
    %v77 = vld [vmem:[%s0 + $0xf0] sm:$0xf]
    %v78 = vld [vmem:[%s0 + $0xf4] sm:$0xf]
    %v79 = vld [vmem:[%s0 + $0xf8] sm:$0xf]
    %v80 = vld [vmem:[%s0 + $0xfc] sm:$0xf]
    %v81 = vld [vmem:[%s1] sm:$0xf]
    %v82 = vld [vmem:[%s1 + $0x4] sm:$0xf]
    %v83 = vld [vmem:[%s1 + $0x8] sm:$0xf]
    %v84 = vld [vmem:[%s1 + $0xc] sm:$0xf]
    %v85 = vld [vmem:[%s1 + $0x10] sm:$0xf]
    %v86 = vld [vmem:[%s1 + $0x14] sm:$0xf]
    %v151 = vunpack.c.l.b16 %v17
    %v152 = vunpack.c.l.b16 %v18
    %v153 = vunpack.c.l.b16 %v19
    %v154 = vunpack.c.l.b16 %v20
    %v155 = vunpack.c.l.b16 %v21
    %v156 = vunpack.c.l.b16 %v22
    %v157 = vunpack.c.l.b16 %v23
    %v158 = vunpack.c.l.b16 %v24
    %v159 = vunpack.c.l.b16 %v25
    %v160 = vunpack.c.l.b16 %v26
    %v161 = vunpack.c.l.b16 %v27
    %v162 = vunpack.c.l.b16 %v28
    %v163 = vunpack.c.l.b16 %v29
    %v164 = vunpack.c.l.b16 %v30
    %v165 = vunpack.c.l.b16 %v31
    %v166 = vunpack.c.l.b16 %v32
    %v167 = vunpack.c.l.b16 %v33
    %v168 = vunpack.c.l.b16 %v34
    %v169 = vunpack.c.l.b16 %v35
    %v170 = vunpack.c.l.b16 %v36
    %v171 = vunpack.c.l.b16 %v37
    %v172 = vunpack.c.l.b16 %v38
    %v173 = vunpack.c.l.b16 %v39
    %v174 = vunpack.c.l.b16 %v40
    %v175 = vunpack.c.l.b16 %v41
    %v176 = vunpack.c.l.b16 %v42
    %v177 = vunpack.c.l.b16 %v43
    %v178 = vunpack.c.l.b16 %v44
    %v179 = vunpack.c.l.b16 %v45
    %v180 = vunpack.c.l.b16 %v46
    %v181 = vunpack.c.l.b16 %v47
    %v182 = vunpack.c.l.b16 %v48
    %v183 = vunpack.c.l.b16 %v49
    %v184 = vunpack.c.l.b16 %v50
    %v185 = vunpack.c.l.b16 %v51
    %v186 = vunpack.c.l.b16 %v52
    %v187 = vunpack.c.l.b16 %v53
    %v188 = vunpack.c.l.b16 %v54
    %v189 = vunpack.c.l.b16 %v55
    %v190 = vunpack.c.l.b16 %v56
    %v191 = vunpack.c.l.b16 %v57
    %v192 = vunpack.c.l.b16 %v58
    %v193 = vunpack.c.l.b16 %v59
    %v194 = vunpack.c.l.b16 %v60
    %v195 = vunpack.c.l.b16 %v61
    %v196 = vunpack.c.l.b16 %v62
    %v197 = vunpack.c.l.b16 %v63
    %v198 = vunpack.c.l.b16 %v64
    %v199 = vunpack.c.l.b16 %v65
    %v200 = vunpack.c.l.b16 %v66
    %v201 = vunpack.c.l.b16 %v67
    %v202 = vunpack.c.l.b16 %v68
    %v203 = vunpack.c.l.b16 %v69
    %v204 = vunpack.c.l.b16 %v70
    %v205 = vunpack.c.l.b16 %v71
    %v206 = vunpack.c.l.b16 %v72
    %v207 = vunpack.c.l.b16 %v73
    %v208 = vunpack.c.l.b16 %v74
    %v209 = vunpack.c.l.b16 %v75
    %v210 = vunpack.c.l.b16 %v76
    %v211 = vunpack.c.l.b16 %v77
    %v212 = vunpack.c.l.b16 %v78
    %v213 = vunpack.c.l.b16 %v79
    %v214 = vunpack.c.l.b16 %v80
    %v215 = vpack.c.b16 %v152, %v151
    %v216 = vpack.c.b16 %v154, %v153
    %v217 = vpack.c.b16 %v156, %v155
    %v218 = vpack.c.b16 %v158, %v157
    %v219 = vpack.c.b16 %v160, %v159
    %v220 = vpack.c.b16 %v162, %v161
    %v221 = vpack.c.b16 %v164, %v163
    %v222 = vpack.c.b16 %v166, %v165
    %v223 = vpack.c.b16 %v168, %v167
    %v224 = vpack.c.b16 %v170, %v169
    %v225 = vpack.c.b16 %v172, %v171
    %v226 = vpack.c.b16 %v174, %v173
    %v227 = vpack.c.b16 %v176, %v175
    %v228 = vpack.c.b16 %v178, %v177
    %v229 = vpack.c.b16 %v180, %v179
    %v230 = vpack.c.b16 %v182, %v181
    %v231 = vpack.c.b16 %v184, %v183
    %v232 = vpack.c.b16 %v186, %v185
    %v233 = vpack.c.b16 %v188, %v187
    %v234 = vpack.c.b16 %v190, %v189
    %v235 = vpack.c.b16 %v192, %v191
    %v236 = vpack.c.b16 %v194, %v193
    %v237 = vpack.c.b16 %v196, %v195
    %v238 = vpack.c.b16 %v198, %v197
    %v239 = vpack.c.b16 %v200, %v199
    %v240 = vpack.c.b16 %v202, %v201
    %v241 = vpack.c.b16 %v204, %v203
    %v242 = vpack.c.b16 %v206, %v205
    %v243 = vpack.c.b16 %v208, %v207
    %v244 = vpack.c.b16 %v210, %v209
    %v245 = vpack.c.b16 %v212, %v211
    %v246 = vpack.c.b16 %v214, %v213
    %v253 = vunpack.c.l.b16 %v81
    %v254 = vunpack.c.l.b16 %v82
    %v255 = vunpack.c.l.b16 %v83
    %v256 = vunpack.c.l.b16 %v84
    %v257 = vunpack.c.l.b16 %v85
    %v258 = vunpack.c.l.b16 %v86
    %v259 = vpack.c.b16 %v254, %v253
    %v260 = vpack.c.b16 %v256, %v255
    %v261 = vpack.c.b16 %v258, %v257
    %vm265 = vcmask 392192
    %v267 = vsel %vm265, %v215, 0
    %v270 = vsel %vm265, %v216, 0
    %v273 = vsel %vm265, %v217, 0
    %v276 = vsel %vm265, %v218, 0
    %v279 = vsel %vm265, %v219, 0
    %v282 = vsel %vm265, %v220, 0
    %v285 = vsel %vm265, %v221, 0
    %v288 = vsel %vm265, %v222, 0
    %v291 = vsel %vm265, %v223, 0
    %v294 = vsel %vm265, %v224, 0
    %v297 = vsel %vm265, %v225, 0
    %v300 = vsel %vm265, %v226, 0
    %v303 = vsel %vm265, %v227, 0
    %v306 = vsel %vm265, %v228, 0
    %v309 = vsel %vm265, %v229, 0
    %v312 = vsel %vm265, %v230, 0
    %v315 = vsel %vm265, %v231, 0
    %v318 = vsel %vm265, %v232, 0
    %v321 = vsel %vm265, %v233, 0
    %v324 = vsel %vm265, %v234, 0
    %v327 = vsel %vm265, %v235, 0
    %v330 = vsel %vm265, %v236, 0
    %v333 = vsel %vm265, %v237, 0
    %v336 = vsel %vm265, %v238, 0
    %v339 = vsel %vm265, %v239, 0
    %v342 = vsel %vm265, %v240, 0
    %v345 = vsel %vm265, %v241, 0
    %v348 = vsel %vm265, %v242, 0
    %v351 = vsel %vm265, %v243, 0
    %v354 = vsel %vm265, %v244, 0
    %v357 = vsel %vm265, %v245, 0
    %v360 = vsel %vm265, %v246, 0
    %362 = vmatprep.subr.bf16.mxu0 0
    %363 = vmatpush1.bf16.msra.mxu0 %v259
    %364 = vmatprep.subr.bf16.mxu0 0
    %365 = vmatpush1.bf16.msra.mxu0 %v260
    %366 = vmatprep.subr.bf16.mxu0 0
    %367 = vmatpush1.bf16.msra.mxu0 %v261
    %368 = vmatprep.subr.bf16.mxu0 0
    %369 = vmatpush1.bf16.msra.mxu0 0
    %370 = vmatprep.subr.bf16.mxu0 0
    %371 = vmatpush1.bf16.msra.mxu0 0
    %372 = vmatprep.subr.bf16.mxu0 0
    %373 = vmatpush1.bf16.msra.mxu0 0
    %374 = vmatprep.subr.bf16.mxu0 0
    %375 = vmatpush1.bf16.msra.mxu0 0
    %376 = vmatprep.subr.bf16.mxu0 0
    %377 = vmatpush1.bf16.msra.mxu0 0
    %378 = vmatprep.subr.bf16.mxu0 0
    %379 = vmatpush1.bf16.msra.mxu0 0
    %380 = vmatprep.subr.bf16.mxu0 0
    %381 = vmatpush1.bf16.msra.mxu0 0
    %382 = vmatprep.subr.bf16.mxu0 0
    %383 = vmatpush1.bf16.msra.mxu0 0
    %384 = vmatprep.subr.bf16.mxu0 0
    %385 = vmatpush1.bf16.msra.mxu0 0
    %386 = vmatprep.subr.bf16.mxu0 0
    %387 = vmatpush1.bf16.msra.mxu0 0
    %388 = vmatprep.subr.bf16.mxu0 0
    %389 = vmatpush1.bf16.msra.mxu0 0
    %390 = vmatprep.subr.bf16.mxu0 0
    %391 = vmatpush1.bf16.msra.mxu0 0
    %392 = vmatprep.subr.bf16.mxu0 0
    %393 = vmatpush1.bf16.msra.mxu0 0
    %394 = vmatprep.mubr.bf16.mxu0 0
    %395 = vmatmul.mubr.bf16.gmra.mrb[0].mxu0 %v267
    %v396 = vpop.f32.mrb[0].mxu0
    %v397 = vadd.f32 0.0, %v396
    %v398 = vpop.f32.mrb[0].mxu0
    %v399 = vpop.f32.mrb[0].mxu0
    %v400 = vadd.f32 0.0, %v399
    %v401 = vpop.f32.mrb[0].mxu0
    %402 = vmatprep.mubr.bf16.mxu0 0
    %403 = vmatmul.mubr.bf16.gmra.mrb[0].mxu0 %v270
    %v404 = vpop.f32.mrb[0].mxu0
    %v405 = vadd.f32 0.0, %v404
    %v406 = vpop.f32.mrb[0].mxu0
    %v407 = vpop.f32.mrb[0].mxu0
    %v408 = vadd.f32 0.0, %v407
    %v409 = vpop.f32.mrb[0].mxu0
    %410 = vmatprep.mubr.bf16.mxu0 0
    %411 = vmatmul.mubr.bf16.gmra.mrb[0].mxu0 %v273
    %v412 = vpop.f32.mrb[0].mxu0
    %v413 = vadd.f32 0.0, %v412
    %v414 = vpop.f32.mrb[0].mxu0
    %v415 = vpop.f32.mrb[0].mxu0
    %v416 = vadd.f32 0.0, %v415
    %v417 = vpop.f32.mrb[0].mxu0
    %418 = vmatprep.mubr.bf16.mxu0 0
    %419 = vmatmul.mubr.bf16.gmra.mrb[0].mxu0 %v276
    %v420 = vpop.f32.mrb[0].mxu0
    %v421 = vadd.f32 0.0, %v420
    %v422 = vpop.f32.mrb[0].mxu0
    %v423 = vpop.f32.mrb[0].mxu0
    %v424 = vadd.f32 0.0, %v423
    %v425 = vpop.f32.mrb[0].mxu0
    %426 = vmatprep.mubr.bf16.mxu0 0
    %427 = vmatmul.mubr.bf16.gmra.mrb[0].mxu0 %v279
    %v428 = vpop.f32.mrb[0].mxu0
    %v429 = vadd.f32 0.0, %v428
    %v430 = vpop.f32.mrb[0].mxu0
    %v431 = vpop.f32.mrb[0].mxu0
    %v432 = vadd.f32 0.0, %v431
    %v433 = vpop.f32.mrb[0].mxu0
    %434 = vmatprep.mubr.bf16.mxu0 0
    %435 = vmatmul.mubr.bf16.gmra.mrb[0].mxu0 %v282
    %v436 = vpop.f32.mrb[0].mxu0
    %v437 = vadd.f32 0.0, %v436
    %v438 = vpop.f32.mrb[0].mxu0
    %v439 = vpop.f32.mrb[0].mxu0
    %v440 = vadd.f32 0.0, %v439
    %v441 = vpop.f32.mrb[0].mxu0
    %442 = vmatprep.mubr.bf16.mxu0 0
    %443 = vmatmul.mubr.bf16.gmra.mrb[0].mxu0 %v285
    %v444 = vpop.f32.mrb[0].mxu0
    %v445 = vadd.f32 0.0, %v444
    %v446 = vpop.f32.mrb[0].mxu0
    %v447 = vpop.f32.mrb[0].mxu0
    %v448 = vadd.f32 0.0, %v447
    %v449 = vpop.f32.mrb[0].mxu0
    %450 = vmatprep.mubr.bf16.mxu0 0
    %451 = vmatmul.mubr.bf16.gmra.mrb[0].mxu0 %v288
    %v452 = vpop.f32.mrb[0].mxu0
    %v453 = vadd.f32 0.0, %v452
    %v454 = vpop.f32.mrb[0].mxu0
    %v455 = vpop.f32.mrb[0].mxu0
    %v456 = vadd.f32 0.0, %v455
    %v457 = vpop.f32.mrb[0].mxu0
    %458 = vmatprep.mubr.bf16.mxu0 0
    %459 = vmatmul.mubr.bf16.gmra.mrb[0].mxu0 %v291
    %v460 = vpop.f32.mrb[0].mxu0
    %v461 = vadd.f32 0.0, %v460
    %v462 = vpop.f32.mrb[0].mxu0
    %v463 = vpop.f32.mrb[0].mxu0
    %v464 = vadd.f32 0.0, %v463
    %v465 = vpop.f32.mrb[0].mxu0
    %466 = vmatprep.mubr.bf16.mxu0 0
    %467 = vmatmul.mubr.bf16.gmra.mrb[0].mxu0 %v294
    %v468 = vpop.f32.mrb[0].mxu0
    %v469 = vadd.f32 0.0, %v468
    %v470 = vpop.f32.mrb[0].mxu0
    %v471 = vpop.f32.mrb[0].mxu0
    %v472 = vadd.f32 0.0, %v471
    %v473 = vpop.f32.mrb[0].mxu0
    %474 = vmatprep.mubr.bf16.mxu0 0
    %475 = vmatmul.mubr.bf16.gmra.mrb[0].mxu0 %v297
    %v476 = vpop.f32.mrb[0].mxu0
    %v477 = vadd.f32 0.0, %v476
    %v478 = vpop.f32.mrb[0].mxu0
    %v479 = vpop.f32.mrb[0].mxu0
    %v480 = vadd.f32 0.0, %v479
    %v481 = vpop.f32.mrb[0].mxu0
    %482 = vmatprep.mubr.bf16.mxu0 0
    %483 = vmatmul.mubr.bf16.gmra.mrb[0].mxu0 %v300
    %v484 = vpop.f32.mrb[0].mxu0
    %v485 = vadd.f32 0.0, %v484
    %v486 = vpop.f32.mrb[0].mxu0
    %v487 = vpop.f32.mrb[0].mxu0
    %v488 = vadd.f32 0.0, %v487
    %v489 = vpop.f32.mrb[0].mxu0
    %490 = vmatprep.mubr.bf16.mxu0 0
    %491 = vmatmul.mubr.bf16.gmra.mrb[0].mxu0 %v303
    %v492 = vpop.f32.mrb[0].mxu0
    %v493 = vadd.f32 0.0, %v492
    %v494 = vpop.f32.mrb[0].mxu0
    %v495 = vpop.f32.mrb[0].mxu0
    %v496 = vadd.f32 0.0, %v495
    %v497 = vpop.f32.mrb[0].mxu0
    %498 = vmatprep.mubr.bf16.mxu0 0
    %499 = vmatmul.mubr.bf16.gmra.mrb[0].mxu0 %v306
    %v500 = vpop.f32.mrb[0].mxu0
    %v501 = vadd.f32 0.0, %v500
    %v502 = vpop.f32.mrb[0].mxu0
    %v503 = vpop.f32.mrb[0].mxu0
    %v504 = vadd.f32 0.0, %v503
    %v505 = vpop.f32.mrb[0].mxu0
    %506 = vmatprep.mubr.bf16.mxu0 0
    %507 = vmatmul.mubr.bf16.gmra.mrb[0].mxu0 %v309
    %v508 = vpop.f32.mrb[0].mxu0
    %v509 = vadd.f32 0.0, %v508
    %v510 = vpop.f32.mrb[0].mxu0
    %v511 = vpop.f32.mrb[0].mxu0
    %v512 = vadd.f32 0.0, %v511
    %v513 = vpop.f32.mrb[0].mxu0
    %514 = vmatprep.mubr.bf16.mxu0 0
    %515 = vmatmul.mubr.bf16.gmra.mrb[0].mxu0 %v312
    %v516 = vpop.f32.mrb[0].mxu0
    %v517 = vadd.f32 0.0, %v516
    %v518 = vpop.f32.mrb[0].mxu0
    %v519 = vpop.f32.mrb[0].mxu0
    %v520 = vadd.f32 0.0, %v519
    %v521 = vpop.f32.mrb[0].mxu0
    %522 = vmatprep.mubr.bf16.mxu0 0
    %523 = vmatmul.mubr.bf16.gmra.mrb[0].mxu0 %v315
    %v524 = vpop.f32.mrb[0].mxu0
    %v525 = vadd.f32 0.0, %v524
    %v526 = vpop.f32.mrb[0].mxu0
    %v527 = vpop.f32.mrb[0].mxu0
    %v528 = vadd.f32 0.0, %v527
    %v529 = vpop.f32.mrb[0].mxu0
    %530 = vmatprep.mubr.bf16.mxu0 0
    %531 = vmatmul.mubr.bf16.gmra.mrb[0].mxu0 %v318
    %v532 = vpop.f32.mrb[0].mxu0
    %v533 = vadd.f32 0.0, %v532
    %v534 = vpop.f32.mrb[0].mxu0
    %v535 = vpop.f32.mrb[0].mxu0
    %v536 = vadd.f32 0.0, %v535
    %v537 = vpop.f32.mrb[0].mxu0
    %538 = vmatprep.mubr.bf16.mxu0 0
    %539 = vmatmul.mubr.bf16.gmra.mrb[0].mxu0 %v321
    %v540 = vpop.f32.mrb[0].mxu0
    %v541 = vadd.f32 0.0, %v540
    %v542 = vpop.f32.mrb[0].mxu0
    %v543 = vpop.f32.mrb[0].mxu0
    %v544 = vadd.f32 0.0, %v543
    %v545 = vpop.f32.mrb[0].mxu0
    %546 = vmatprep.mubr.bf16.mxu0 0
    %547 = vmatmul.mubr.bf16.gmra.mrb[0].mxu0 %v324
    %v548 = vpop.f32.mrb[0].mxu0
    %v549 = vadd.f32 0.0, %v548
    %v550 = vpop.f32.mrb[0].mxu0
    %v551 = vpop.f32.mrb[0].mxu0
    %v552 = vadd.f32 0.0, %v551
    %v553 = vpop.f32.mrb[0].mxu0
    %554 = vmatprep.mubr.bf16.mxu0 0
    %555 = vmatmul.mubr.bf16.gmra.mrb[0].mxu0 %v327
    %v556 = vpop.f32.mrb[0].mxu0
    %v557 = vadd.f32 0.0, %v556
    %v558 = vpop.f32.mrb[0].mxu0
    %v559 = vpop.f32.mrb[0].mxu0
    %v560 = vadd.f32 0.0, %v559
    %v561 = vpop.f32.mrb[0].mxu0
    %562 = vmatprep.mubr.bf16.mxu0 0
    %563 = vmatmul.mubr.bf16.gmra.mrb[0].mxu0 %v330
    %v564 = vpop.f32.mrb[0].mxu0
    %v565 = vadd.f32 0.0, %v564
    %v566 = vpop.f32.mrb[0].mxu0
    %v567 = vpop.f32.mrb[0].mxu0
    %v568 = vadd.f32 0.0, %v567
    %v569 = vpop.f32.mrb[0].mxu0
    %570 = vmatprep.mubr.bf16.mxu0 0
    %571 = vmatmul.mubr.bf16.gmra.mrb[0].mxu0 %v333
    %v572 = vpop.f32.mrb[0].mxu0
    %v573 = vadd.f32 0.0, %v572
    %v574 = vpop.f32.mrb[0].mxu0
    %v575 = vpop.f32.mrb[0].mxu0
    %v576 = vadd.f32 0.0, %v575
    %v577 = vpop.f32.mrb[0].mxu0
    %578 = vmatprep.mubr.bf16.mxu0 0
    %579 = vmatmul.mubr.bf16.gmra.mrb[0].mxu0 %v336
    %v580 = vpop.f32.mrb[0].mxu0
    %v581 = vadd.f32 0.0, %v580
    %v582 = vpop.f32.mrb[0].mxu0
    %v583 = vpop.f32.mrb[0].mxu0
    %v584 = vadd.f32 0.0, %v583
    %v585 = vpop.f32.mrb[0].mxu0
    %586 = vmatprep.mubr.bf16.mxu0 0
    %587 = vmatmul.mubr.bf16.gmra.mrb[0].mxu0 %v339
    %v588 = vpop.f32.mrb[0].mxu0
    %v589 = vadd.f32 0.0, %v588
    %v590 = vpop.f32.mrb[0].mxu0
    %v591 = vpop.f32.mrb[0].mxu0
    %v592 = vadd.f32 0.0, %v591
    %v593 = vpop.f32.mrb[0].mxu0
    %594 = vmatprep.mubr.bf16.mxu0 0
    %595 = vmatmul.mubr.bf16.gmra.mrb[0].mxu0 %v342
    %v596 = vpop.f32.mrb[0].mxu0
    %v597 = vadd.f32 0.0, %v596
    %v598 = vpop.f32.mrb[0].mxu0
    %v599 = vpop.f32.mrb[0].mxu0
    %v600 = vadd.f32 0.0, %v599
    %v601 = vpop.f32.mrb[0].mxu0
    %602 = vmatprep.mubr.bf16.mxu0 0
    %603 = vmatmul.mubr.bf16.gmra.mrb[0].mxu0 %v345
    %v604 = vpop.f32.mrb[0].mxu0
    %v605 = vadd.f32 0.0, %v604
    %v606 = vpop.f32.mrb[0].mxu0
    %v607 = vpop.f32.mrb[0].mxu0
    %v608 = vadd.f32 0.0, %v607
    %v609 = vpop.f32.mrb[0].mxu0
    %610 = vmatprep.mubr.bf16.mxu0 0
    %611 = vmatmul.mubr.bf16.gmra.mrb[0].mxu0 %v348
    %v612 = vpop.f32.mrb[0].mxu0
    %v613 = vadd.f32 0.0, %v612
    %v614 = vpop.f32.mrb[0].mxu0
    %v615 = vpop.f32.mrb[0].mxu0
    %v616 = vadd.f32 0.0, %v615
    %v617 = vpop.f32.mrb[0].mxu0
    %618 = vmatprep.mubr.bf16.mxu0 0
    %619 = vmatmul.mubr.bf16.gmra.mrb[0].mxu0 %v351
    %v620 = vpop.f32.mrb[0].mxu0
    %v621 = vadd.f32 0.0, %v620
    %v622 = vpop.f32.mrb[0].mxu0
    %v623 = vpop.f32.mrb[0].mxu0
    %v624 = vadd.f32 0.0, %v623
    %v625 = vpop.f32.mrb[0].mxu0
    %626 = vmatprep.mubr.bf16.mxu0 0
    %627 = vmatmul.mubr.bf16.gmra.mrb[0].mxu0 %v354
    %v628 = vpop.f32.mrb[0].mxu0
    %v629 = vadd.f32 0.0, %v628
    %v630 = vpop.f32.mrb[0].mxu0
    %v631 = vpop.f32.mrb[0].mxu0
    %v632 = vadd.f32 0.0, %v631
    %v633 = vpop.f32.mrb[0].mxu0
    %634 = vmatprep.mubr.bf16.mxu0 0
    %635 = vmatmul.mubr.bf16.gmra.mrb[0].mxu0 %v357
    %v636 = vpop.f32.mrb[0].mxu0
    %v637 = vadd.f32 0.0, %v636
    %v638 = vpop.f32.mrb[0].mxu0
    %v639 = vpop.f32.mrb[0].mxu0
    %v640 = vadd.f32 0.0, %v639
    %v641 = vpop.f32.mrb[0].mxu0
    %642 = vmatprep.mubr.bf16.mxu0 0
    %643 = vmatmul.mubr.bf16.gmra.mrb[0].mxu0 %v360
    %v644 = vpop.f32.mrb[0].mxu0
    %v645 = vadd.f32 0.0, %v644
    %v646 = vpop.f32.mrb[0].mxu0
    %v647 = vpop.f32.mrb[0].mxu0
    %v648 = vadd.f32 0.0, %v647
    %v649 = vpop.f32.mrb[0].mxu0
    %650 = vdwg.mxu0
    %p651 = scmp.eq.s32.totalorder 0, 0
    // Predicated region
    $region10: #{tpu_custom_call.1} parent=1 // pred_check
      %p652 = pneg %p651
    $region11: #{tpu_custom_call.1} parent=1 // pred_check_branch
      %654 = sbr.rel (%p652) target = $region13
    $region12: #{tpu_custom_call.1} parent=1 // pred_region
      %655 = vst [vmem:[#allocation2] sm:$0xff] %v397
      %656 = vst [vmem:[#allocation2 + $0x8] sm:$0xff] %v400
      %657 = vst [vmem:[#allocation2 + $0x10] sm:$0xff] %v405
      %658 = vst [vmem:[#allocation2 + $0x18] sm:$0xff] %v408
      %659 = vst [vmem:[#allocation2 + $0x20] sm:$0xff] %v413
      %660 = vst [vmem:[#allocation2 + $0x28] sm:$0xff] %v416
      %661 = vst [vmem:[#allocation2 + $0x30] sm:$0xff] %v421
      %662 = vst [vmem:[#allocation2 + $0x38] sm:$0xff] %v424
      %663 = vst [vmem:[#allocation2 + $0x40] sm:$0xff] %v429
      %664 = vst [vmem:[#allocation2 + $0x48] sm:$0xff] %v432
      %665 = vst [vmem:[#allocation2 + $0x50] sm:$0xff] %v437
      %666 = vst [vmem:[#allocation2 + $0x58] sm:$0xff] %v440
      %667 = vst [vmem:[#allocation2 + $0x60] sm:$0xff] %v445
      %668 = vst [vmem:[#allocation2 + $0x68] sm:$0xff] %v448
      %669 = vst [vmem:[#allocation2 + $0x70] sm:$0xff] %v453
      %670 = vst [vmem:[#allocation2 + $0x78] sm:$0xff] %v456
      %671 = vst [vmem:[#allocation2 + $0x80] sm:$0xff] %v461
      %672 = vst [vmem:[#allocation2 + $0x88] sm:$0xff] %v464
      %673 = vst [vmem:[#allocation2 + $0x90] sm:$0xff] %v469
      %674 = vst [vmem:[#allocation2 + $0x98] sm:$0xff] %v472
      %675 = vst [vmem:[#allocation2 + $0xa0] sm:$0xff] %v477
      %676 = vst [vmem:[#allocation2 + $0xa8] sm:$0xff] %v480
      %677 = vst [vmem:[#allocation2 + $0xb0] sm:$0xff] %v485
      %678 = vst [vmem:[#allocation2 + $0xb8] sm:$0xff] %v488
      %679 = vst [vmem:[#allocation2 + $0xc0] sm:$0xff] %v493
      %680 = vst [vmem:[#allocation2 + $0xc8] sm:$0xff] %v496
      %681 = vst [vmem:[#allocation2 + $0xd0] sm:$0xff] %v501
      %682 = vst [vmem:[#allocation2 + $0xd8] sm:$0xff] %v504
      %683 = vst [vmem:[#allocation2 + $0xe0] sm:$0xff] %v509
      %684 = vst [vmem:[#allocation2 + $0xe8] sm:$0xff] %v512
      %685 = vst [vmem:[#allocation2 + $0xf0] sm:$0xff] %v517
      %686 = vst [vmem:[#allocation2 + $0xf8] sm:$0xff] %v520
      %687 = vst [vmem:[#allocation2 + $0x100] sm:$0xff] %v525
      %688 = vst [vmem:[#allocation2 + $0x108] sm:$0xff] %v528
      %689 = vst [vmem:[#allocation2 + $0x110] sm:$0xff] %v533
      %690 = vst [vmem:[#allocation2 + $0x118] sm:$0xff] %v536
      %691 = vst [vmem:[#allocation2 + $0x120] sm:$0xff] %v541
      %692 = vst [vmem:[#allocation2 + $0x128] sm:$0xff] %v544
      %693 = vst [vmem:[#allocation2 + $0x130] sm:$0xff] %v549
      %694 = vst [vmem:[#allocation2 + $0x138] sm:$0xff] %v552
      %695 = vst [vmem:[#allocation2 + $0x140] sm:$0xff] %v557
      %696 = vst [vmem:[#allocation2 + $0x148] sm:$0xff] %v560
      %697 = vst [vmem:[#allocation2 + $0x150] sm:$0xff] %v565
      %698 = vst [vmem:[#allocation2 + $0x158] sm:$0xff] %v568
      %699 = vst [vmem:[#allocation2 + $0x160] sm:$0xff] %v573
      %700 = vst [vmem:[#allocation2 + $0x168] sm:$0xff] %v576
      %701 = vst [vmem:[#allocation2 + $0x170] sm:$0xff] %v581
      %702 = vst [vmem:[#allocation2 + $0x178] sm:$0xff] %v584
      %703 = vst [vmem:[#allocation2 + $0x180] sm:$0xff] %v589
      %704 = vst [vmem:[#allocation2 + $0x188] sm:$0xff] %v592
      %705 = vst [vmem:[#allocation2 + $0x190] sm:$0xff] %v597
      %706 = vst [vmem:[#allocation2 + $0x198] sm:$0xff] %v600
      %707 = vst [vmem:[#allocation2 + $0x1a0] sm:$0xff] %v605
      %708 = vst [vmem:[#allocation2 + $0x1a8] sm:$0xff] %v608
      %709 = vst [vmem:[#allocation2 + $0x1b0] sm:$0xff] %v613
      %710 = vst [vmem:[#allocation2 + $0x1b8] sm:$0xff] %v616
      %711 = vst [vmem:[#allocation2 + $0x1c0] sm:$0xff] %v621
      %712 = vst [vmem:[#allocation2 + $0x1c8] sm:$0xff] %v624
      %713 = vst [vmem:[#allocation2 + $0x1d0] sm:$0xff] %v629
      %714 = vst [vmem:[#allocation2 + $0x1d8] sm:$0xff] %v632
      %715 = vst [vmem:[#allocation2 + $0x1e0] sm:$0xff] %v637
      %716 = vst [vmem:[#allocation2 + $0x1e8] sm:$0xff] %v640
      %717 = vst [vmem:[#allocation2 + $0x1f0] sm:$0xff] %v645
      %718 = vst [vmem:[#allocation2 + $0x1f8] sm:$0xff] %v648
    $region13: #{tpu_custom_call.1} parent=1 // pred_fallthru
      _
    %p719 = scmp.gt.s32.totalorder 0, 0
    // Predicated region
    $region14: #{tpu_custom_call.1} parent=1 // pred_check
      %p720 = pneg %p719
    $region15: #{tpu_custom_call.1} parent=1 // pred_check_branch
      %722 = sbr.rel (%p720) target = $region17
    $region16: #{tpu_custom_call.1} parent=1 // pred_region
      %v723 = vld [vmem:[#allocation2] sm:$0xff]
      %v724 = vld [vmem:[#allocation2 + $0x8] sm:$0xff]
      %v725 = vld [vmem:[#allocation2 + $0x10] sm:$0xff]
      %v726 = vld [vmem:[#allocation2 + $0x18] sm:$0xff]
      %v727 = vld [vmem:[#allocation2 + $0x20] sm:$0xff]
      %v728 = vld [vmem:[#allocation2 + $0x28] sm:$0xff]
      %v729 = vld [vmem:[#allocation2 + $0x30] sm:$0xff]
      %v730 = vld [vmem:[#allocation2 + $0x38] sm:$0xff]
      %v731 = vld [vmem:[#allocation2 + $0x40] sm:$0xff]
      %v732 = vld [vmem:[#allocation2 + $0x48] sm:$0xff]
      %v733 = vld [vmem:[#allocation2 + $0x50] sm:$0xff]
      %v734 = vld [vmem:[#allocation2 + $0x58] sm:$0xff]
      %v735 = vld [vmem:[#allocation2 + $0x60] sm:$0xff]
      %v736 = vld [vmem:[#allocation2 + $0x68] sm:$0xff]
      %v737 = vld [vmem:[#allocation2 + $0x70] sm:$0xff]
      %v738 = vld [vmem:[#allocation2 + $0x78] sm:$0xff]
      %v739 = vld [vmem:[#allocation2 + $0x80] sm:$0xff]
      %v740 = vld [vmem:[#allocation2 + $0x88] sm:$0xff]
      %v741 = vld [vmem:[#allocation2 + $0x90] sm:$0xff]
      %v742 = vld [vmem:[#allocation2 + $0x98] sm:$0xff]
      %v743 = vld [vmem:[#allocation2 + $0xa0] sm:$0xff]
      %v744 = vld [vmem:[#allocation2 + $0xa8] sm:$0xff]
      %v745 = vld [vmem:[#allocation2 + $0xb0] sm:$0xff]
      %v746 = vld [vmem:[#allocation2 + $0xb8] sm:$0xff]
      %v747 = vld [vmem:[#allocation2 + $0xc0] sm:$0xff]
      %v748 = vld [vmem:[#allocation2 + $0xc8] sm:$0xff]
      %v749 = vld [vmem:[#allocation2 + $0xd0] sm:$0xff]
      %v750 = vld [vmem:[#allocation2 + $0xd8] sm:$0xff]
      %v751 = vld [vmem:[#allocation2 + $0xe0] sm:$0xff]
      %v752 = vld [vmem:[#allocation2 + $0xe8] sm:$0xff]
      %v753 = vld [vmem:[#allocation2 + $0xf0] sm:$0xff]
      %v754 = vld [vmem:[#allocation2 + $0xf8] sm:$0xff]
      %v755 = vld [vmem:[#allocation2 + $0x100] sm:$0xff]
      %v756 = vld [vmem:[#allocation2 + $0x108] sm:$0xff]
      %v757 = vld [vmem:[#allocation2 + $0x110] sm:$0xff]
      %v758 = vld [vmem:[#allocation2 + $0x118] sm:$0xff]
      %v759 = vld [vmem:[#allocation2 + $0x120] sm:$0xff]
      %v760 = vld [vmem:[#allocation2 + $0x128] sm:$0xff]
      %v761 = vld [vmem:[#allocation2 + $0x130] sm:$0xff]
      %v762 = vld [vmem:[#allocation2 + $0x138] sm:$0xff]
      %v763 = vld [vmem:[#allocation2 + $0x140] sm:$0xff]
      %v764 = vld [vmem:[#allocation2 + $0x148] sm:$0xff]
      %v765 = vld [vmem:[#allocation2 + $0x150] sm:$0xff]
      %v766 = vld [vmem:[#allocation2 + $0x158] sm:$0xff]
      %v767 = vld [vmem:[#allocation2 + $0x160] sm:$0xff]
      %v768 = vld [vmem:[#allocation2 + $0x168] sm:$0xff]
      %v769 = vld [vmem:[#allocation2 + $0x170] sm:$0xff]
      %v770 = vld [vmem:[#allocation2 + $0x178] sm:$0xff]
      %v771 = vld [vmem:[#allocation2 + $0x180] sm:$0xff]
      %v772 = vld [vmem:[#allocation2 + $0x188] sm:$0xff]
      %v773 = vld [vmem:[#allocation2 + $0x190] sm:$0xff]
      %v774 = vld [vmem:[#allocation2 + $0x198] sm:$0xff]
      %v775 = vld [vmem:[#allocation2 + $0x1a0] sm:$0xff]
      %v776 = vld [vmem:[#allocation2 + $0x1a8] sm:$0xff]
      %v777 = vld [vmem:[#allocation2 + $0x1b0] sm:$0xff]
      %v778 = vld [vmem:[#allocation2 + $0x1b8] sm:$0xff]
      %v779 = vld [vmem:[#allocation2 + $0x1c0] sm:$0xff]
      %v780 = vld [vmem:[#allocation2 + $0x1c8] sm:$0xff]
      %v781 = vld [vmem:[#allocation2 + $0x1d0] sm:$0xff]
      %v782 = vld [vmem:[#allocation2 + $0x1d8] sm:$0xff]
      %v783 = vld [vmem:[#allocation2 + $0x1e0] sm:$0xff]
      %v784 = vld [vmem:[#allocation2 + $0x1e8] sm:$0xff]
      %v785 = vld [vmem:[#allocation2 + $0x1f0] sm:$0xff]
      %v786 = vld [vmem:[#allocation2 + $0x1f8] sm:$0xff]
      %v787 = vadd.f32 %v723, %v397
      %v788 = vadd.f32 %v724, %v400
      %v789 = vadd.f32 %v725, %v405
      %v790 = vadd.f32 %v726, %v408
      %v791 = vadd.f32 %v727, %v413
      %v792 = vadd.f32 %v728, %v416
      %v793 = vadd.f32 %v729, %v421
      %v794 = vadd.f32 %v730, %v424
      %v795 = vadd.f32 %v731, %v429
      %v796 = vadd.f32 %v732, %v432
      %v797 = vadd.f32 %v733, %v437
      %v798 = vadd.f32 %v734, %v440
      %v799 = vadd.f32 %v735, %v445
      %v800 = vadd.f32 %v736, %v448
      %v801 = vadd.f32 %v737, %v453
      %v802 = vadd.f32 %v738, %v456
      %v803 = vadd.f32 %v739, %v461
      %v804 = vadd.f32 %v740, %v464
      %v805 = vadd.f32 %v741, %v469
      %v806 = vadd.f32 %v742, %v472
      %v807 = vadd.f32 %v743, %v477
      %v808 = vadd.f32 %v744, %v480
      %v809 = vadd.f32 %v745, %v485
      %v810 = vadd.f32 %v746, %v488
      %v811 = vadd.f32 %v747, %v493
      %v812 = vadd.f32 %v748, %v496
      %v813 = vadd.f32 %v749, %v501
      %v814 = vadd.f32 %v750, %v504
      %v815 = vadd.f32 %v751, %v509
      %v816 = vadd.f32 %v752, %v512
      %v817 = vadd.f32 %v753, %v517
      %v818 = vadd.f32 %v754, %v520
      %v819 = vadd.f32 %v755, %v525
      %v820 = vadd.f32 %v756, %v528
      %v821 = vadd.f32 %v757, %v533
      %v822 = vadd.f32 %v758, %v536
      %v823 = vadd.f32 %v759, %v541
      %v824 = vadd.f32 %v760, %v544
      %v825 = vadd.f32 %v761, %v549
      %v826 = vadd.f32 %v762, %v552
      %v827 = vadd.f32 %v763, %v557
      %v828 = vadd.f32 %v764, %v560
      %v829 = vadd.f32 %v765, %v565
      %v830 = vadd.f32 %v766, %v568
      %v831 = vadd.f32 %v767, %v573
      %v832 = vadd.f32 %v768, %v576
      %v833 = vadd.f32 %v769, %v581
      %v834 = vadd.f32 %v770, %v584
      %v835 = vadd.f32 %v771, %v589
      %v836 = vadd.f32 %v772, %v592
      %v837 = vadd.f32 %v773, %v597
      %v838 = vadd.f32 %v774, %v600
      %v839 = vadd.f32 %v775, %v605
      %v840 = vadd.f32 %v776, %v608
      %v841 = vadd.f32 %v777, %v613
      %v842 = vadd.f32 %v778, %v616
      %v843 = vadd.f32 %v779, %v621
      %v844 = vadd.f32 %v780, %v624
      %v845 = vadd.f32 %v781, %v629
      %v846 = vadd.f32 %v782, %v632
      %v847 = vadd.f32 %v783, %v637
      %v848 = vadd.f32 %v784, %v640
      %v849 = vadd.f32 %v785, %v645
      %v850 = vadd.f32 %v786, %v648
      %851 = vst [vmem:[#allocation2] sm:$0xff] %v787
      %852 = vst [vmem:[#allocation2 + $0x8] sm:$0xff] %v788
      %853 = vst [vmem:[#allocation2 + $0x10] sm:$0xff] %v789
      %854 = vst [vmem:[#allocation2 + $0x18] sm:$0xff] %v790
      %855 = vst [vmem:[#allocation2 + $0x20] sm:$0xff] %v791
      %856 = vst [vmem:[#allocation2 + $0x28] sm:$0xff] %v792
      %857 = vst [vmem:[#allocation2 + $0x30] sm:$0xff] %v793
      %858 = vst [vmem:[#allocation2 + $0x38] sm:$0xff] %v794
      %859 = vst [vmem:[#allocation2 + $0x40] sm:$0xff] %v795
      %860 = vst [vmem:[#allocation2 + $0x48] sm:$0xff] %v796
      %861 = vst [vmem:[#allocation2 + $0x50] sm:$0xff] %v797
      %862 = vst [vmem:[#allocation2 + $0x58] sm:$0xff] %v798
      %863 = vst [vmem:[#allocation2 + $0x60] sm:$0xff] %v799
      %864 = vst [vmem:[#allocation2 + $0x68] sm:$0xff] %v800
      %865 = vst [vmem:[#allocation2 + $0x70] sm:$0xff] %v801
      %866 = vst [vmem:[#allocation2 + $0x78] sm:$0xff] %v802
      %867 = vst [vmem:[#allocation2 + $0x80] sm:$0xff] %v803
      %868 = vst [vmem:[#allocation2 + $0x88] sm:$0xff] %v804
      %869 = vst [vmem:[#allocation2 + $0x90] sm:$0xff] %v805
      %870 = vst [vmem:[#allocation2 + $0x98] sm:$0xff] %v806
      %871 = vst [vmem:[#allocation2 + $0xa0] sm:$0xff] %v807
      %872 = vst [vmem:[#allocation2 + $0xa8] sm:$0xff] %v808
      %873 = vst [vmem:[#allocation2 + $0xb0] sm:$0xff] %v809
      %874 = vst [vmem:[#allocation2 + $0xb8] sm:$0xff] %v810
      %875 = vst [vmem:[#allocation2 + $0xc0] sm:$0xff] %v811
      %876 = vst [vmem:[#allocation2 + $0xc8] sm:$0xff] %v812
      %877 = vst [vmem:[#allocation2 + $0xd0] sm:$0xff] %v813
      %878 = vst [vmem:[#allocation2 + $0xd8] sm:$0xff] %v814
      %879 = vst [vmem:[#allocation2 + $0xe0] sm:$0xff] %v815
      %880 = vst [vmem:[#allocation2 + $0xe8] sm:$0xff] %v816
      %881 = vst [vmem:[#allocation2 + $0xf0] sm:$0xff] %v817
      %882 = vst [vmem:[#allocation2 + $0xf8] sm:$0xff] %v818
      %883 = vst [vmem:[#allocation2 + $0x100] sm:$0xff] %v819
      %884 = vst [vmem:[#allocation2 + $0x108] sm:$0xff] %v820
      %885 = vst [vmem:[#allocation2 + $0x110] sm:$0xff] %v821
      %886 = vst [vmem:[#allocation2 + $0x118] sm:$0xff] %v822
      %887 = vst [vmem:[#allocation2 + $0x120] sm:$0xff] %v823
      %888 = vst [vmem:[#allocation2 + $0x128] sm:$0xff] %v824
      %889 = vst [vmem:[#allocation2 + $0x130] sm:$0xff] %v825
      %890 = vst [vmem:[#allocation2 + $0x138] sm:$0xff] %v826
      %891 = vst [vmem:[#allocation2 + $0x140] sm:$0xff] %v827
      %892 = vst [vmem:[#allocation2 + $0x148] sm:$0xff] %v828
      %893 = vst [vmem:[#allocation2 + $0x150] sm:$0xff] %v829
      %894 = vst [vmem:[#allocation2 + $0x158] sm:$0xff] %v830
      %895 = vst [vmem:[#allocation2 + $0x160] sm:$0xff] %v831
      %896 = vst [vmem:[#allocation2 + $0x168] sm:$0xff] %v832
      %897 = vst [vmem:[#allocation2 + $0x170] sm:$0xff] %v833
      %898 = vst [vmem:[#allocation2 + $0x178] sm:$0xff] %v834
      %899 = vst [vmem:[#allocation2 + $0x180] sm:$0xff] %v835
      %900 = vst [vmem:[#allocation2 + $0x188] sm:$0xff] %v836
      %901 = vst [vmem:[#allocation2 + $0x190] sm:$0xff] %v837
      %902 = vst [vmem:[#allocation2 + $0x198] sm:$0xff] %v838
      %903 = vst [vmem:[#allocation2 + $0x1a0] sm:$0xff] %v839
      %904 = vst [vmem:[#allocation2 + $0x1a8] sm:$0xff] %v840
      %905 = vst [vmem:[#allocation2 + $0x1b0] sm:$0xff] %v841
      %906 = vst [vmem:[#allocation2 + $0x1b8] sm:$0xff] %v842
      %907 = vst [vmem:[#allocation2 + $0x1c0] sm:$0xff] %v843
      %908 = vst [vmem:[#allocation2 + $0x1c8] sm:$0xff] %v844
      %909 = vst [vmem:[#allocation2 + $0x1d0] sm:$0xff] %v845
      %910 = vst [vmem:[#allocation2 + $0x1d8] sm:$0xff] %v846
      %911 = vst [vmem:[#allocation2 + $0x1e0] sm:$0xff] %v847
      %912 = vst [vmem:[#allocation2 + $0x1e8] sm:$0xff] %v848
      %913 = vst [vmem:[#allocation2 + $0x1f0] sm:$0xff] %v849
      %914 = vst [vmem:[#allocation2 + $0x1f8] sm:$0xff] %v850
    $region17: #{tpu_custom_call.1} parent=1 // pred_fallthru
      _
    // Predicated region
    $region18: #{tpu_custom_call.1} parent=1 // pred_check
      %p915 = pneg %p651
    $region19: #{tpu_custom_call.1} parent=1 // pred_check_branch
      %917 = sbr.rel (%p915) target = $region21
    $region20: #{tpu_custom_call.1} parent=1 // pred_region
      %v918 = vld [vmem:[#allocation2] sm:$0xff]
      %v919 = vld [vmem:[#allocation2 + $0x8] sm:$0xff]
      %v920 = vld [vmem:[#allocation2 + $0x10] sm:$0xff]
      %v921 = vld [vmem:[#allocation2 + $0x18] sm:$0xff]
      %v922 = vld [vmem:[#allocation2 + $0x20] sm:$0xff]
      %v923 = vld [vmem:[#allocation2 + $0x28] sm:$0xff]
      %v924 = vld [vmem:[#allocation2 + $0x30] sm:$0xff]
      %v925 = vld [vmem:[#allocation2 + $0x38] sm:$0xff]
      %v926 = vld [vmem:[#allocation2 + $0x40] sm:$0xff]
      %v927 = vld [vmem:[#allocation2 + $0x48] sm:$0xff]
      %v928 = vld [vmem:[#allocation2 + $0x50] sm:$0xff]
      %v929 = vld [vmem:[#allocation2 + $0x58] sm:$0xff]
      %v930 = vld [vmem:[#allocation2 + $0x60] sm:$0xff]
      %v931 = vld [vmem:[#allocation2 + $0x68] sm:$0xff]
      %v932 = vld [vmem:[#allocation2 + $0x70] sm:$0xff]
      %v933 = vld [vmem:[#allocation2 + $0x78] sm:$0xff]
      %v934 = vld [vmem:[#allocation2 + $0x80] sm:$0xff]
      %v935 = vld [vmem:[#allocation2 + $0x88] sm:$0xff]
      %v936 = vld [vmem:[#allocation2 + $0x90] sm:$0xff]
      %v937 = vld [vmem:[#allocation2 + $0x98] sm:$0xff]
      %v938 = vld [vmem:[#allocation2 + $0xa0] sm:$0xff]
      %v939 = vld [vmem:[#allocation2 + $0xa8] sm:$0xff]
      %v940 = vld [vmem:[#allocation2 + $0xb0] sm:$0xff]
      %v941 = vld [vmem:[#allocation2 + $0xb8] sm:$0xff]
      %v942 = vld [vmem:[#allocation2 + $0xc0] sm:$0xff]
      %v943 = vld [vmem:[#allocation2 + $0xc8] sm:$0xff]
      %v944 = vld [vmem:[#allocation2 + $0xd0] sm:$0xff]
      %v945 = vld [vmem:[#allocation2 + $0xd8] sm:$0xff]
      %v946 = vld [vmem:[#allocation2 + $0xe0] sm:$0xff]
      %v947 = vld [vmem:[#allocation2 + $0xe8] sm:$0xff]
      %v948 = vld [vmem:[#allocation2 + $0xf0] sm:$0xff]
      %v949 = vld [vmem:[#allocation2 + $0xf8] sm:$0xff]
      %v950 = vld [vmem:[#allocation2 + $0x100] sm:$0xff]
      %v951 = vld [vmem:[#allocation2 + $0x108] sm:$0xff]
      %v952 = vld [vmem:[#allocation2 + $0x110] sm:$0xff]
      %v953 = vld [vmem:[#allocation2 + $0x118] sm:$0xff]
      %v954 = vld [vmem:[#allocation2 + $0x120] sm:$0xff]
      %v955 = vld [vmem:[#allocation2 + $0x128] sm:$0xff]
      %v956 = vld [vmem:[#allocation2 + $0x130] sm:$0xff]
      %v957 = vld [vmem:[#allocation2 + $0x138] sm:$0xff]
      %v958 = vld [vmem:[#allocation2 + $0x140] sm:$0xff]
      %v959 = vld [vmem:[#allocation2 + $0x148] sm:$0xff]
      %v960 = vld [vmem:[#allocation2 + $0x150] sm:$0xff]
      %v961 = vld [vmem:[#allocation2 + $0x158] sm:$0xff]
      %v962 = vld [vmem:[#allocation2 + $0x160] sm:$0xff]
      %v963 = vld [vmem:[#allocation2 + $0x168] sm:$0xff]
      %v964 = vld [vmem:[#allocation2 + $0x170] sm:$0xff]
      %v965 = vld [vmem:[#allocation2 + $0x178] sm:$0xff]
      %v966 = vld [vmem:[#allocation2 + $0x180] sm:$0xff]
      %v967 = vld [vmem:[#allocation2 + $0x188] sm:$0xff]
      %v968 = vld [vmem:[#allocation2 + $0x190] sm:$0xff]
      %v969 = vld [vmem:[#allocation2 + $0x198] sm:$0xff]
      %v970 = vld [vmem:[#allocation2 + $0x1a0] sm:$0xff]
      %v971 = vld [vmem:[#allocation2 + $0x1a8] sm:$0xff]
      %v972 = vld [vmem:[#allocation2 + $0x1b0] sm:$0xff]
      %v973 = vld [vmem:[#allocation2 + $0x1b8] sm:$0xff]
      %v974 = vld [vmem:[#allocation2 + $0x1c0] sm:$0xff]
      %v975 = vld [vmem:[#allocation2 + $0x1c8] sm:$0xff]
      %v976 = vld [vmem:[#allocation2 + $0x1d0] sm:$0xff]
      %v977 = vld [vmem:[#allocation2 + $0x1d8] sm:$0xff]
      %v978 = vld [vmem:[#allocation2 + $0x1e0] sm:$0xff]
      %v979 = vld [vmem:[#allocation2 + $0x1e8] sm:$0xff]
      %v980 = vld [vmem:[#allocation2 + $0x1f0] sm:$0xff]
      %v981 = vld [vmem:[#allocation2 + $0x1f8] sm:$0xff]
      %v982 = vadd.f32 %v918, %v919
      %v983 = vadd.f32 %v982, %v920
      %v984 = vadd.f32 %v983, %v921
      %v985 = vadd.f32 %v984, %v922
      %v986 = vadd.f32 %v985, %v923
      %v987 = vadd.f32 %v986, %v924
      %v988 = vadd.f32 %v987, %v925
      %v989 = vadd.f32 %v988, %v926
      %v990 = vadd.f32 %v989, %v927
      %v991 = vadd.f32 %v990, %v928
      %v992 = vadd.f32 %v991, %v929
      %v993 = vadd.f32 %v992, %v930
      %v994 = vadd.f32 %v993, %v931
      %v995 = vadd.f32 %v994, %v932
      %v996 = vadd.f32 %v995, %v933
      %v997 = vadd.f32 %v996, %v934
      %v998 = vadd.f32 %v997, %v935
      %v999 = vadd.f32 %v998, %v936
      %v1000 = vadd.f32 %v999, %v937
      %v1001 = vadd.f32 %v1000, %v938
      %v1002 = vadd.f32 %v1001, %v939
      %v1003 = vadd.f32 %v1002, %v940
      %v1004 = vadd.f32 %v1003, %v941
      %v1005 = vadd.f32 %v1004, %v942
      %v1006 = vadd.f32 %v1005, %v943
      %v1007 = vadd.f32 %v1006, %v944
      %v1008 = vadd.f32 %v1007, %v945
      %v1009 = vadd.f32 %v1008, %v946
      %v1010 = vadd.f32 %v1009, %v947
      %v1011 = vadd.f32 %v1010, %v948
      %v1012 = vadd.f32 %v1011, %v949
      %v1013 = vadd.f32 %v1012, %v950
      %v1014 = vadd.f32 %v1013, %v951
      %v1015 = vadd.f32 %v1014, %v952
      %v1016 = vadd.f32 %v1015, %v953
      %v1017 = vadd.f32 %v1016, %v954
      %v1018 = vadd.f32 %v1017, %v955
      %v1019 = vadd.f32 %v1018, %v956
      %v1020 = vadd.f32 %v1019, %v957
      %v1021 = vadd.f32 %v1020, %v958
      %v1022 = vadd.f32 %v1021, %v959
      %v1023 = vadd.f32 %v1022, %v960
      %v1024 = vadd.f32 %v1023, %v961
      %v1025 = vadd.f32 %v1024, %v962
      %v1026 = vadd.f32 %v1025, %v963
      %v1027 = vadd.f32 %v1026, %v964
      %v1028 = vadd.f32 %v1027, %v965
      %v1029 = vadd.f32 %v1028, %v966
      %v1030 = vadd.f32 %v1029, %v967
      %v1031 = vadd.f32 %v1030, %v968
      %v1032 = vadd.f32 %v1031, %v969
      %v1033 = vadd.f32 %v1032, %v970
      %v1034 = vadd.f32 %v1033, %v971
      %v1035 = vadd.f32 %v1034, %v972
      %v1036 = vadd.f32 %v1035, %v973
      %v1037 = vadd.f32 %v1036, %v974
      %v1038 = vadd.f32 %v1037, %v975
      %v1039 = vadd.f32 %v1038, %v976
      %v1040 = vadd.f32 %v1039, %v977
      %v1041 = vadd.f32 %v1040, %v978
      %v1042 = vadd.f32 %v1041, %v979
      %v1043 = vadd.f32 %v1042, %v980
      %v1044 = vadd.f32 %v1043, %v981
      %v1045 = vrot.slane %v1044, 4
      %v1046 = vadd.f32 %v1044, %v1045
      %v1047 = vrot.slane %v1046, 2
      %v1048 = vadd.f32 %v1046, %v1047
      %v1049 = vrot.slane %v1048, 1
      %v1050 = vadd.f32 %v1048, %v1049
      %1051 = vst [vmem:[#allocation4] sm:$0x1] %v1050
      %v1052 = vmul.f32 %v918, %v918
      %v1053 = vmul.f32 %v919, %v919
      %v1054 = vmul.f32 %v920, %v920
      %v1055 = vmul.f32 %v921, %v921
      %v1056 = vmul.f32 %v922, %v922
      %v1057 = vmul.f32 %v923, %v923
      %v1058 = vmul.f32 %v924, %v924
      %v1059 = vmul.f32 %v925, %v925
      %v1060 = vmul.f32 %v926, %v926
      %v1061 = vmul.f32 %v927, %v927
      %v1062 = vmul.f32 %v928, %v928
      %v1063 = vmul.f32 %v929, %v929
      %v1064 = vmul.f32 %v930, %v930
      %v1065 = vmul.f32 %v931, %v931
      %v1066 = vmul.f32 %v932, %v932
      %v1067 = vmul.f32 %v933, %v933
      %v1068 = vmul.f32 %v934, %v934
      %v1069 = vmul.f32 %v935, %v935
      %v1070 = vmul.f32 %v936, %v936
      %v1071 = vmul.f32 %v937, %v937
      %v1072 = vmul.f32 %v938, %v938
      %v1073 = vmul.f32 %v939, %v939
      %v1074 = vmul.f32 %v940, %v940
      %v1075 = vmul.f32 %v941, %v941
      %v1076 = vmul.f32 %v942, %v942
      %v1077 = vmul.f32 %v943, %v943
      %v1078 = vmul.f32 %v944, %v944
      %v1079 = vmul.f32 %v945, %v945
      %v1080 = vmul.f32 %v946, %v946
      %v1081 = vmul.f32 %v947, %v947
      %v1082 = vmul.f32 %v948, %v948
      %v1083 = vmul.f32 %v949, %v949
      %v1084 = vmul.f32 %v950, %v950
      %v1085 = vmul.f32 %v951, %v951
      %v1086 = vmul.f32 %v952, %v952
      %v1087 = vmul.f32 %v953, %v953
      %v1088 = vmul.f32 %v954, %v954
      %v1089 = vmul.f32 %v955, %v955
      %v1090 = vmul.f32 %v956, %v956
      %v1091 = vmul.f32 %v957, %v957
      %v1092 = vmul.f32 %v958, %v958
      %v1093 = vmul.f32 %v959, %v959
      %v1094 = vmul.f32 %v960, %v960
      %v1095 = vmul.f32 %v961, %v961
      %v1096 = vmul.f32 %v962, %v962
      %v1097 = vmul.f32 %v963, %v963
      %v1098 = vmul.f32 %v964, %v964
      %v1099 = vmul.f32 %v965, %v965
      %v1100 = vmul.f32 %v966, %v966
      %v1101 = vmul.f32 %v967, %v967
      %v1102 = vmul.f32 %v968, %v968
      %v1103 = vmul.f32 %v969, %v969
      %v1104 = vmul.f32 %v970, %v970
      %v1105 = vmul.f32 %v971, %v971
      %v1106 = vmul.f32 %v972, %v972
      %v1107 = vmul.f32 %v973, %v973
      %v1108 = vmul.f32 %v974, %v974
      %v1109 = vmul.f32 %v975, %v975
      %v1110 = vmul.f32 %v976, %v976
      %v1111 = vmul.f32 %v977, %v977
      %v1112 = vmul.f32 %v978, %v978
      %v1113 = vmul.f32 %v979, %v979
      %v1114 = vmul.f32 %v980, %v980
      %v1115 = vmul.f32 %v981, %v981
      %v1116 = vadd.f32 %v1052, %v1053
      %v1117 = vadd.f32 %v1116, %v1054
      %v1118 = vadd.f32 %v1117, %v1055
      %v1119 = vadd.f32 %v1118, %v1056
      %v1120 = vadd.f32 %v1119, %v1057
      %v1121 = vadd.f32 %v1120, %v1058
      %v1122 = vadd.f32 %v1121, %v1059
      %v1123 = vadd.f32 %v1122, %v1060
      %v1124 = vadd.f32 %v1123, %v1061
      %v1125 = vadd.f32 %v1124, %v1062
      %v1126 = vadd.f32 %v1125, %v1063
      %v1127 = vadd.f32 %v1126, %v1064
      %v1128 = vadd.f32 %v1127, %v1065
      %v1129 = vadd.f32 %v1128, %v1066
      %v1130 = vadd.f32 %v1129, %v1067
      %v1131 = vadd.f32 %v1130, %v1068
      %v1132 = vadd.f32 %v1131, %v1069
      %v1133 = vadd.f32 %v1132, %v1070
      %v1134 = vadd.f32 %v1133, %v1071
      %v1135 = vadd.f32 %v1134, %v1072
      %v1136 = vadd.f32 %v1135, %v1073
      %v1137 = vadd.f32 %v1136, %v1074
      %v1138 = vadd.f32 %v1137, %v1075
      %v1139 = vadd.f32 %v1138, %v1076
      %v1140 = vadd.f32 %v1139, %v1077
      %v1141 = vadd.f32 %v1140, %v1078
      %v1142 = vadd.f32 %v1141, %v1079
      %v1143 = vadd.f32 %v1142, %v1080
      %v1144 = vadd.f32 %v1143, %v1081
      %v1145 = vadd.f32 %v1144, %v1082
      %v1146 = vadd.f32 %v1145, %v1083
      %v1147 = vadd.f32 %v1146, %v1084
      %v1148 = vadd.f32 %v1147, %v1085
      %v1149 = vadd.f32 %v1148, %v1086
      %v1150 = vadd.f32 %v1149, %v1087
      %v1151 = vadd.f32 %v1150, %v1088
      %v1152 = vadd.f32 %v1151, %v1089
      %v1153 = vadd.f32 %v1152, %v1090
      %v1154 = vadd.f32 %v1153, %v1091
      %v1155 = vadd.f32 %v1154, %v1092
      %v1156 = vadd.f32 %v1155, %v1093
      %v1157 = vadd.f32 %v1156, %v1094
      %v1158 = vadd.f32 %v1157, %v1095
      %v1159 = vadd.f32 %v1158, %v1096
      %v1160 = vadd.f32 %v1159, %v1097
      %v1161 = vadd.f32 %v1160, %v1098
      %v1162 = vadd.f32 %v1161, %v1099
      %v1163 = vadd.f32 %v1162, %v1100
      %v1164 = vadd.f32 %v1163, %v1101
      %v1165 = vadd.f32 %v1164, %v1102
      %v1166 = vadd.f32 %v1165, %v1103
      %v1167 = vadd.f32 %v1166, %v1104
      %v1168 = vadd.f32 %v1167, %v1105
      %v1169 = vadd.f32 %v1168, %v1106
      %v1170 = vadd.f32 %v1169, %v1107
      %v1171 = vadd.f32 %v1170, %v1108
      %v1172 = vadd.f32 %v1171, %v1109
      %v1173 = vadd.f32 %v1172, %v1110
      %v1174 = vadd.f32 %v1173, %v1111
      %v1175 = vadd.f32 %v1174, %v1112
      %v1176 = vadd.f32 %v1175, %v1113
      %v1177 = vadd.f32 %v1176, %v1114
      %v1178 = vadd.f32 %v1177, %v1115
      %v1179 = vrot.slane %v1178, 4
      %v1180 = vadd.f32 %v1178, %v1179
      %v1181 = vrot.slane %v1180, 2
      %v1182 = vadd.f32 %v1180, %v1181
      %v1183 = vrot.slane %v1182, 1
      %v1184 = vadd.f32 %v1182, %v1183
      %1185 = vst [vmem:[#allocation6] sm:$0x1] %v1184
    $region21: #{tpu_custom_call.1} parent=1 // pred_fallthru
      _
    // Predicated region
    $region22: #{tpu_custom_call.1} parent=1 // pred_check
      _
    $region23: #{tpu_custom_call.1} parent=1 // pred_check_branch
      %1187 = sbr.rel (0) target = $region25
    $region24: #{tpu_custom_call.1} parent=1 // pred_region
      %s1189 = ssub.s32 8192, 8192
      %1190 = vsyncadd [#allocation3], %s1189
      %s1191 = sshll.u32 [#allocation2], 4
      %s1192 = int_to_ptr.vmem [resolvable:$true] %s1191
      %1197 = dma.vmem_to_hbm [thread:$0]  %s1192, 8192, %s2, [#allocation3], 128, 128, 8
    $region25: #{tpu_custom_call.1} parent=1 // pred_fallthru
      _
    // Predicated region
    $region26: #{tpu_custom_call.1} parent=1 // pred_check
      _
    $region27: #{tpu_custom_call.1} parent=1 // pred_check_branch
      %1199 = sbr.rel (0) target = $region29
    $region28: #{tpu_custom_call.1} parent=1 // pred_region
      %s1201 = ssub.s32 16, 16
      %1202 = vsyncadd [#allocation5], %s1201
      %s1204 = sshll.u32 [#allocation4], 4
      %s1205 = int_to_ptr.vmem [resolvable:$true] %s1204
      %1207 = dma.vmem_to_hbm [thread:$0]  %s1205, 16, %s3, [#allocation5]
    $region29: #{tpu_custom_call.1} parent=1 // pred_fallthru
      _
    // Predicated region
    $region30: #{tpu_custom_call.1} parent=1 // pred_check
      _
    $region31: #{tpu_custom_call.1} parent=1 // pred_check_branch
      %1209 = sbr.rel (0) target = $region33
    $region32: #{tpu_custom_call.1} parent=1 // pred_region
      %s1211 = ssub.s32 16, 16
      %1212 = vsyncadd [#allocation5], %s1211
      %s1214 = sshll.u32 [#allocation6], 4
      %s1215 = int_to_ptr.vmem [resolvable:$true] %s1214
      %1217 = dma.vmem_to_hbm [thread:$0]  %s1215, 16, %s4, [#allocation5]
    $region33: #{tpu_custom_call.1} parent=1 // pred_fallthru
      _
    // Predicated region
    $region34: #{tpu_custom_call.1} parent=1 // pred_check
      _
    $region35: #{tpu_custom_call.1} parent=1 // pred_check_branch
      %1219 = sbr.rel (0) target = $region37
    $region36: #{tpu_custom_call.1} parent=1 // pred_region
      %1220 = dma.done [#allocation3], 8192
    $region37: #{tpu_custom_call.1} parent=1 // pred_fallthru
      _
    // Predicated region
    $region38: #{tpu_custom_call.1} parent=1 // pred_check
      _
    $region39: #{tpu_custom_call.1} parent=1 // pred_check_branch
      %1222 = sbr.rel (0) target = $region41
    $region40: #{tpu_custom_call.1} parent=1 // pred_region
      %1223 = dma.done [#allocation5], 16
    $region41: #{tpu_custom_call.1} parent=1 // pred_fallthru
      _
    // Predicated region
    $region42: #{tpu_custom_call.1} parent=1 // pred_check
      _
    $region43: #{tpu_custom_call.1} parent=1 // pred_check_branch
      %1225 = sbr.rel (0) target = $region45
    $region44: #{tpu_custom_call.1} parent=1 // pred_region
      %1226 = dma.done [#allocation5], 16
    $region45: #{tpu_custom_call.1} parent=1 // pred_fallthru
      _
    %1227 = vsyncpa [#allocation3], 1
    %1228 = vsyncpa [#allocation5], 1

</llo_original>
